<compile_context>
chip_gen: v7x
topology: tpu7x:2x2x1
jax: 0.10.0
libtpu: 0.0.40
codegen_flags: <defaults>
</compile_context>

<pallas_src>
import jax
import jax.numpy as jnp
from jax.experimental import pallas as pl
from jax.experimental.pallas import tpu as pltpu

N_INPUTS = 784
IN_PAD = 896            # 7 * 128, lane-aligned input width
HIDDEN = 128
N_OUTPUTS = 10
OUT_PAD = 128           # lane-dense output width
NEG_FILL = -1e11        # PyTorch fills with -100000000000.0


def _round_up(n, m):
    return ((n + m - 1) // m) * m


def mlp_forward_kernel(x_ref,                       # (TB, 896)  bf16
                       w1_ref, b1_ref,              # (896,128) bf16, (1,128) f32
                       w2_ref, b2_ref,              # (128,128) bf16, (1,128) f32
                       w3_ref, b3_ref,              # (128,128) bf16, (1,128) f32
                       w4_ref, b4_ref,              # (128,128) bf16, (1,128) f32
                       o_ref):                      # (TB, 128) f32
    # Layer 1: bf16 operands on the MXU, f32 accumulate; bias/ReLU in f32.
    h = jnp.dot(x_ref[...], w1_ref[...], preferred_element_type=jnp.float32)
    h = jnp.maximum(h + b1_ref[...], 0.0)
    # Layer 2
    h = jnp.dot(h.astype(jnp.bfloat16), w2_ref[...],
                preferred_element_type=jnp.float32)
    h = jnp.maximum(h + b2_ref[...], 0.0)
    # Layer 3
    h = jnp.dot(h.astype(jnp.bfloat16), w3_ref[...],
                preferred_element_type=jnp.float32)
    h = jnp.maximum(h + b3_ref[...], 0.0)
    # Output layer: task mask + lane padding already folded into w4/b4
    # (masked/padded columns: zero weights + -1e11 bias), so this is a plain
    # lane-dense (TB,128) unmasked store.
    o_ref[...] = jnp.dot(h.astype(jnp.bfloat16), w4_ref[...],
                         preferred_element_type=jnp.float32) + b4_ref[...]


def net_forward(x, params, task, *, is_cifar=False, nc_per_task=N_OUTPUTS,
                block_b=512):
    """Pallas implementation of Net.forward(x, t) for the MLP branch."""
    # compute_offsets (static Python, exactly as in the PyTorch module)
    if is_cifar:
        offset1 = int(task) * nc_per_task
        offset2 = (int(task) + 1) * nc_per_task
    else:
        offset1, offset2 = 0, N_OUTPUTS

    (w1, b1), (w2, b2), (w3, b3), (w4, b4) = params
    B = x.shape[0]

    # ---- wrapper-side layout prep (cheap one-off XLA ops) ----------------
    # 1) pad input features 784 -> 896 with zeros (identical numerics).
    x_p = jnp.pad(x, ((0, 0), (0, IN_PAD - N_INPUTS)))
    w1_p = jnp.pad(w1, ((0, IN_PAD - N_INPUTS), (0, 0)))

    # 2) lane-dense final layer: pad to 128 output columns and fold the
    #    task-offset fill into the padded weights/bias (zero weight column +
    #    -1e11 bias  ==  output column == -1e11 exactly).
    col = jnp.arange(OUT_PAD)
    keep = (col >= offset1) & (col < offset2) & (col < N_OUTPUTS)
    w4_p = jnp.pad(w4, ((0, 0), (0, OUT_PAD - N_OUTPUTS)))
    b4_p = jnp.pad(b4, ((0, 0), (0, OUT_PAD - N_OUTPUTS)))
    w4_p = jnp.where(keep[None, :], w4_p, 0.0)
    b4_p = jnp.where(keep[None, :], b4_p, jnp.float32(NEG_FILL))

    # 3) bf16 matmul operands (f32 accumulation in-kernel), f32 biases.
    x_p = x_p.astype(jnp.bfloat16)
    w1_b = w1_p.astype(jnp.bfloat16)
    w2_b = w2.astype(jnp.bfloat16)
    w3_b = w3.astype(jnp.bfloat16)
    w4_b = w4_p.astype(jnp.bfloat16)

    # 4) batch tiling: largest tile that amortizes per-step overhead while
    #    staying well inside v7x's 64 MiB VMEM even double-buffered
    #    (x tile @ 512x896 bf16 ~ 0.9 MiB, out tile 512x128 f32 = 0.25 MiB).
    tb = min(block_b, _round_up(B, 8))
    b_pad = _round_up(B, tb)
    if b_pad != B:
        x_p = jnp.pad(x_p, ((0, b_pad - B), (0, 0)))

    def resident(shape):
        # Same block every grid step -> weights stay VMEM-resident.
        return pl.BlockSpec(shape, lambda i: (0, 0))

    out = pl.pallas_call(
        mlp_forward_kernel,
        out_shape=jax.ShapeDtypeStruct((b_pad, OUT_PAD), jnp.float32),
        grid=(b_pad // tb,),
        in_specs=[
            pl.BlockSpec((tb, IN_PAD), lambda i: (i, 0)),      # x: streamed
            resident((IN_PAD, HIDDEN)), resident((1, HIDDEN)),
            resident((HIDDEN, HIDDEN)), resident((1, HIDDEN)),
            resident((HIDDEN, HIDDEN)), resident((1, HIDDEN)),
            resident((HIDDEN, OUT_PAD)), resident((1, OUT_PAD)),
        ],
        out_specs=pl.BlockSpec((tb, OUT_PAD), lambda i: (i, 0)),
        compiler_params=pltpu.CompilerParams(
            dimension_semantics=("parallel",)),
    )(x_p, w1_b, b1, w2_b, b2, w3_b, b3, w4_b, b4_p)

    return out[:B, :N_OUTPUTS]


def init_params(key):
    """Deterministic init mimicking nn.Linear default (uniform +-1/sqrt(fan_in))."""
    dims = [N_INPUTS, HIDDEN, HIDDEN, HIDDEN, N_OUTPUTS]
    params = []
    for i in range(4):
        key, kw, kb = jax.random.split(key, 3)
        bound = 1.0 / jnp.sqrt(dims[i])
        w = jax.random.uniform(kw, (dims[i], dims[i + 1]), jnp.float32, -bound, bound)
        b = jax.random.uniform(kb, (1, dims[i + 1]), jnp.float32, -bound, bound)
        params.append((w, b))
    return params


def net_forward_ref(x, params, offset1, offset2):
    """Pure-JAX reference with the same bf16-operand / f32-accumulate math."""
    (w1, b1), (w2, b2), (w3, b3), (w4, b4) = params
    bf = lambda a: a.astype(jnp.bfloat16)
    dot = lambda a, b: jnp.dot(bf(a), bf(b), preferred_element_type=jnp.float32)
    h = jnp.maximum(dot(x, w1) + b1, 0.0)
    h = jnp.maximum(dot(h, w2) + b2, 0.0)
    h = jnp.maximum(dot(h, w3) + b3, 0.0)
    out = dot(h, w4) + b4
    col = jnp.arange(N_OUTPUTS)[None, :]
    out = jnp.where(col < offset1, NEG_FILL, out)
    out = jnp.where(col >= offset2, NEG_FILL, out)
    return out


if __name__ == "__main__":
    key = jax.random.PRNGKey(0)
    kx, kp = jax.random.split(key)

    batch = 16                                      # small test batch
    x = jax.random.normal(kx, (batch, N_INPUTS), dtype=jnp.float32)
    params = init_params(kp)

    # MLP branch (is_cifar=False): mask is a no-op.  block_b=8 -> grid of 2
    # so the streamed-batch pipeline path is exercised.
    out = jax.block_until_ready(net_forward(x, params, task=0, block_b=8))
    ref = net_forward_ref(x, params, 0, N_OUTPUTS)
    assert out.shape == (batch, N_OUTPUTS), out.shape
    assert jnp.allclose(out, ref, atol=1e-2, rtol=1e-2), "mismatch (mlp branch)"

    # notMNIST-style branch (is_cifar=True, nc_per_task = 10/5 = 2, task=1):
    # columns outside [2, 4) must be exactly -1e11.
    out_c = jax.block_until_ready(
        net_forward(x, params, task=1, is_cifar=True, nc_per_task=2, block_b=8))
    ref_c = net_forward_ref(x, params, 2, 4)
    assert jnp.allclose(out_c, ref_c, atol=1e-2, rtol=1e-2), "mismatch (cifar branch)"
    assert jnp.all(out_c[:, :2] == NEG_FILL) and jnp.all(out_c[:, 4:] == NEG_FILL)

    # Default large-tile path (grid of 1 for this batch).
    out_d = jax.block_until_ready(net_forward(x, params, task=0))
    assert jnp.allclose(out_d, ref, atol=1e-2, rtol=1e-2), "mismatch (default tile)"

    # TODO(synk): observe()/adapt()/memory_sampling() are training-time state
    # machinery (SGD inner loops, replay buffers, numpy sampling) and the
    # ResNet18 branches are not part of this MLP forward pass; not kernels.
    print("KERNEL_OK")
</pallas_src>

<mosaic_0001>
module attributes {stable_mosaic.version = 11 : i64} {
  func.func @mlp_forward_kernel(%arg0: i32, %arg1: memref<8x896xbf16, #tpu.memory_space<vmem>>, %arg2: memref<896x128xbf16, #tpu.memory_space<vmem>>, %arg3: memref<1x128xf32, #tpu.memory_space<vmem>>, %arg4: memref<128x128xbf16, #tpu.memory_space<vmem>>, %arg5: memref<1x128xf32, #tpu.memory_space<vmem>>, %arg6: memref<128x128xbf16, #tpu.memory_space<vmem>>, %arg7: memref<1x128xf32, #tpu.memory_space<vmem>>, %arg8: memref<128x128xbf16, #tpu.memory_space<vmem>>, %arg9: memref<1x128xf32, #tpu.memory_space<vmem>>, %arg10: memref<8x128xf32, #tpu.memory_space<vmem>>) attributes {dimension_semantics = [#tpu.dimension_semantics<parallel>], iteration_bounds = array<i64: 2>, scalar_prefetch = 0 : i64, scratch_operands = 0 : i64, tpu.core_type = #tpu.core_type<tc>, window_params = [{transform_indices = @transform_0, window_bounds = array<i64: 8, 896>}, {pipeline_mode = #tpu.pipeline_mode<synchronous>, transform_indices = @transform_1, window_bounds = array<i64: 896, 128>}, {pipeline_mode = #tpu.pipeline_mode<synchronous>, transform_indices = @transform_2, window_bounds = array<i64: 1, 128>}, {pipeline_mode = #tpu.pipeline_mode<synchronous>, transform_indices = @transform_3, window_bounds = array<i64: 128, 128>}, {pipeline_mode = #tpu.pipeline_mode<synchronous>, transform_indices = @transform_4, window_bounds = array<i64: 1, 128>}, {pipeline_mode = #tpu.pipeline_mode<synchronous>, transform_indices = @transform_5, window_bounds = array<i64: 128, 128>}, {pipeline_mode = #tpu.pipeline_mode<synchronous>, transform_indices = @transform_6, window_bounds = array<i64: 1, 128>}, {pipeline_mode = #tpu.pipeline_mode<synchronous>, transform_indices = @transform_7, window_bounds = array<i64: 128, 128>}, {pipeline_mode = #tpu.pipeline_mode<synchronous>, transform_indices = @transform_8, window_bounds = array<i64: 1, 128>}, {transform_indices = @transform_9, window_bounds = array<i64: 8, 128>}]} {
    %c0 = arith.constant 0 : index
    %c0_0 = arith.constant 0 : index
    %0 = vector.load %arg1[%c0, %c0_0] : memref<8x896xbf16, #tpu.memory_space<vmem>>, vector<8x896xbf16>
    %c0_1 = arith.constant 0 : index
    %c0_2 = arith.constant 0 : index
    %1 = vector.load %arg2[%c0_1, %c0_2] : memref<896x128xbf16, #tpu.memory_space<vmem>>, vector<896x128xbf16>
    %cst = arith.constant dense<0.000000e+00> : vector<8x128xf32>
    %2 = tpu.matmul %0, %1, %cst {dimension_numbers = #tpu.dot_dimension_numbers<[1], [0], [0], [1], [0, 0, 1, 1], [], []>} : vector<8x896xbf16>, vector<896x128xbf16>, vector<8x128xf32> -> vector<8x128xf32>
    %c0_3 = arith.constant 0 : index
    %c0_4 = arith.constant 0 : index
    %3 = vector.load %arg3[%c0_3, %c0_4] : memref<1x128xf32, #tpu.memory_space<vmem>>, vector<1x128xf32>
    %4 = vector.broadcast %3 : vector<1x128xf32> to vector<8x128xf32>
    %5 = arith.addf %2, %4 : vector<8x128xf32>
    %cst_5 = arith.constant 0.000000e+00 : f32
    %6 = vector.broadcast %cst_5 : f32 to vector<8x128xf32>
    %7 = arith.maximumf %5, %6 : vector<8x128xf32>
    %8 = arith.truncf %7 : vector<8x128xf32> to vector<8x128xbf16>
    %c0_6 = arith.constant 0 : index
    %c0_7 = arith.constant 0 : index
    %9 = vector.load %arg4[%c0_6, %c0_7] : memref<128x128xbf16, #tpu.memory_space<vmem>>, vector<128x128xbf16>
    %cst_8 = arith.constant dense<0.000000e+00> : vector<8x128xf32>
    %10 = tpu.matmul %8, %9, %cst_8 {dimension_numbers = #tpu.dot_dimension_numbers<[1], [0], [0], [1], [0, 0, 1, 1], [], []>} : vector<8x128xbf16>, vector<128x128xbf16>, vector<8x128xf32> -> vector<8x128xf32>
    %c0_9 = arith.constant 0 : index
    %c0_10 = arith.constant 0 : index
    %11 = vector.load %arg5[%c0_9, %c0_10] : memref<1x128xf32, #tpu.memory_space<vmem>>, vector<1x128xf32>
    %12 = vector.broadcast %11 : vector<1x128xf32> to vector<8x128xf32>
    %13 = arith.addf %10, %12 : vector<8x128xf32>
    %cst_11 = arith.constant 0.000000e+00 : f32
    %14 = vector.broadcast %cst_11 : f32 to vector<8x128xf32>
    %15 = arith.maximumf %13, %14 : vector<8x128xf32>
    %16 = arith.truncf %15 : vector<8x128xf32> to vector<8x128xbf16>
    %c0_12 = arith.constant 0 : index
    %c0_13 = arith.constant 0 : index
    %17 = vector.load %arg6[%c0_12, %c0_13] : memref<128x128xbf16, #tpu.memory_space<vmem>>, vector<128x128xbf16>
    %cst_14 = arith.constant dense<0.000000e+00> : vector<8x128xf32>
    %18 = tpu.matmul %16, %17, %cst_14 {dimension_numbers = #tpu.dot_dimension_numbers<[1], [0], [0], [1], [0, 0, 1, 1], [], []>} : vector<8x128xbf16>, vector<128x128xbf16>, vector<8x128xf32> -> vector<8x128xf32>
    %c0_15 = arith.constant 0 : index
    %c0_16 = arith.constant 0 : index
    %19 = vector.load %arg7[%c0_15, %c0_16] : memref<1x128xf32, #tpu.memory_space<vmem>>, vector<1x128xf32>
    %20 = vector.broadcast %19 : vector<1x128xf32> to vector<8x128xf32>
    %21 = arith.addf %18, %20 : vector<8x128xf32>
    %cst_17 = arith.constant 0.000000e+00 : f32
    %22 = vector.broadcast %cst_17 : f32 to vector<8x128xf32>
    %23 = arith.maximumf %21, %22 : vector<8x128xf32>
    %24 = arith.truncf %23 : vector<8x128xf32> to vector<8x128xbf16>
    %c0_18 = arith.constant 0 : index
    %c0_19 = arith.constant 0 : index
    %25 = vector.load %arg8[%c0_18, %c0_19] : memref<128x128xbf16, #tpu.memory_space<vmem>>, vector<128x128xbf16>
    %cst_20 = arith.constant dense<0.000000e+00> : vector<8x128xf32>
    %26 = tpu.matmul %24, %25, %cst_20 {dimension_numbers = #tpu.dot_dimension_numbers<[1], [0], [0], [1], [0, 0, 1, 1], [], []>} : vector<8x128xbf16>, vector<128x128xbf16>, vector<8x128xf32> -> vector<8x128xf32>
    %c0_21 = arith.constant 0 : index
    %c0_22 = arith.constant 0 : index
    %27 = vector.load %arg9[%c0_21, %c0_22] : memref<1x128xf32, #tpu.memory_space<vmem>>, vector<1x128xf32>
    %28 = vector.broadcast %27 : vector<1x128xf32> to vector<8x128xf32>
    %29 = arith.addf %26, %28 : vector<8x128xf32>
    %c0_23 = arith.constant 0 : index
    %c0_24 = arith.constant 0 : index
    %30 = vector.load %arg10[%c0_23, %c0_24] : memref<8x128xf32, #tpu.memory_space<vmem>>, vector<8x128xf32>
    tpu.vector_store %arg10[%c0_23, %c0_24], %29 {strides = array<i32>} : memref<8x128xf32, #tpu.memory_space<vmem>>, vector<8x128xf32>,
    return
  }
  func.func @transform_0(%arg0: i32) -> (i32, i32) {
    %c0_i32 = arith.constant 0 : i32
    %c0_i32_0 = arith.constant 0 : i32
    return %arg0, %c0_i32 : i32, i32
  }
  func.func @transform_1(%arg0: i32) -> (i32, i32) {
    %c0_i32 = arith.constant 0 : i32
    %c0_i32_0 = arith.constant 0 : i32
    %c0_i32_1 = arith.constant 0 : i32
    return %c0_i32, %c0_i32_0 : i32, i32
  }
  func.func @transform_2(%arg0: i32) -> (i32, i32) {
    %c0_i32 = arith.constant 0 : i32
    %c0_i32_0 = arith.constant 0 : i32
    %c0_i32_1 = arith.constant 0 : i32
    return %c0_i32, %c0_i32_0 : i32, i32
  }
  func.func @transform_3(%arg0: i32) -> (i32, i32) {
    %c0_i32 = arith.constant 0 : i32
    %c0_i32_0 = arith.constant 0 : i32
    %c0_i32_1 = arith.constant 0 : i32
    return %c0_i32, %c0_i32_0 : i32, i32
  }
  func.func @transform_4(%arg0: i32) -> (i32, i32) {
    %c0_i32 = arith.constant 0 : i32
    %c0_i32_0 = arith.constant 0 : i32
    %c0_i32_1 = arith.constant 0 : i32
    return %c0_i32, %c0_i32_0 : i32, i32
  }
  func.func @transform_5(%arg0: i32) -> (i32, i32) {
    %c0_i32 = arith.constant 0 : i32
    %c0_i32_0 = arith.constant 0 : i32
    %c0_i32_1 = arith.constant 0 : i32
    return %c0_i32, %c0_i32_0 : i32, i32
  }
  func.func @transform_6(%arg0: i32) -> (i32, i32) {
    %c0_i32 = arith.constant 0 : i32
    %c0_i32_0 = arith.constant 0 : i32
    %c0_i32_1 = arith.constant 0 : i32
    return %c0_i32, %c0_i32_0 : i32, i32
  }
  func.func @transform_7(%arg0: i32) -> (i32, i32) {
    %c0_i32 = arith.constant 0 : i32
    %c0_i32_0 = arith.constant 0 : i32
    %c0_i32_1 = arith.constant 0 : i32
    return %c0_i32, %c0_i32_0 : i32, i32
  }
  func.func @transform_8(%arg0: i32) -> (i32, i32) {
    %c0_i32 = arith.constant 0 : i32
    %c0_i32_0 = arith.constant 0 : i32
    %c0_i32_1 = arith.constant 0 : i32
    return %c0_i32, %c0_i32_0 : i32, i32
  }
  func.func @transform_9(%arg0: i32) -> (i32, i32) {
    %c0_i32 = arith.constant 0 : i32
    %c0_i32_0 = arith.constant 0 : i32
    return %arg0, %c0_i32 : i32, i32
  }
}

</mosaic_0001>

<llo_original>
// kernel: tpu_custom_call.1
$region0: #{tpu_custom_call.1}
  #allocation0 [shape = 'u32[]', space=smem, size = 0x4, offset = 0x4, fixed_abs, tag = 'smem constant byte address 0x4 - core index']
  #allocation1 [shape = 'u32[144,128]{1,0:T(1,128)}', space=vmem, size = 0x12000, scoped, tag = 'internal scratch']
  %s0 = inlined_call_operand.hbm [shape: bf16[16,896], index: 0, kind: input, shape index: {}]
  %s1 = inlined_call_operand.hbm [shape: bf16[896,128], index: 1, kind: input, shape index: {}]
  %s2 = inlined_call_operand.vmem [shape: f32[1,128], index: 2, kind: input, shape index: {}]
  %s3 = inlined_call_operand.hbm [shape: bf16[128,128], index: 3, kind: input, shape index: {}]
  %s4 = inlined_call_operand.vmem [shape: f32[1,128], index: 4, kind: input, shape index: {}]
  %s5 = inlined_call_operand.hbm [shape: bf16[128,128], index: 5, kind: input, shape index: {}]
  %s6 = inlined_call_operand.vmem [shape: f32[1,128], index: 6, kind: input, shape index: {}]
  %s7 = inlined_call_operand.hbm [shape: bf16[128,128], index: 7, kind: input, shape index: {}]
  %s8 = inlined_call_operand.vmem [shape: f32[1,128], index: 8, kind: input, shape index: {}]
  %s9 = inlined_call_operand.hbm [shape: f32[16,128], index: 9, kind: output, shape index: {}]
  %s10 = sld [smem:[#allocation0]]
  $region89: #{tpu_custom_call.1} parent=0
    _
  %s12 = ssub.s32 1, %s10
  %s13 = scalar_select 0, %s12, %s10
  $region1: #{tpu_custom_call.1} parent=0
    #allocation2 [shape = 'u8[28672]{0}', space=vmem, size = 0x7000, scoped, tag = 'input window, operand 0']
    #allocation3 [shape = 's32[2]{0}', space=sflag, size = 0x8, scoped, tag = 'scoped memory for tpu_custom_call.1']
    #allocation4 [shape = 's32[2]{0}', space=sflag, size = 0x8, scoped, tag = 'scoped memory for tpu_custom_call.1']
    #allocation5 [shape = 'u8[229376]{0}', space=vmem, size = 0x38000, scoped, tag = 'input window, operand 1, single buffered']
    #allocation6 [shape = 's32[1]{0}', space=sflag, size = 0x4, scoped, tag = 'scoped memory for tpu_custom_call.1']
    #allocation7 [shape = 'u8[32768]{0}', space=vmem, size = 0x8000, scoped, tag = 'input window, operand 3, single buffered']
    #allocation8 [shape = 'u8[32768]{0}', space=vmem, size = 0x8000, scoped, tag = 'input window, operand 5, single buffered']
    #allocation9 [shape = 's32[1]{0}', space=sflag, size = 0x4, scoped, tag = 'scoped memory for tpu_custom_call.1']
    #allocation10 [shape = 'u8[32768]{0}', space=vmem, size = 0x8000, scoped, tag = 'input window, operand 7, single buffered']
    #allocation11 [shape = 'u8[8192]{0}', space=vmem, size = 0x2000, scoped, tag = 'output window, operand 0']
    %14 = vsyncpa [#allocation3], 0
    %s15 = scalar_lea.sflag [#allocation3], 1
    %16 = vsyncpa %s15, 0
    %17 = vsyncpa [#allocation6], 0
    %18 = vsyncpa [#allocation9], 0
    %19 = vsyncpa [#allocation4], 0
    %s20 = scalar_lea.sflag [#allocation4], 1
    %21 = vsyncpa %s20, 0
    loop: start=0, step=1, limit=4
    $region2: #{tpu_custom_call.1} parent=1 // loop_pre_header
      _
    $region3: #{tpu_custom_call.1} parent=1 // loop_header
      %s23 = sphi 0, %s27
      %p24 = scmp.ge.s32.totalorder %s23, 4
      %s33 = sphi 0, %s35
      %s36 = sphi 0, %s33
      %s37 = sphi 0, %s36
      %s53 = sphi 0, %s37
      %s57 = sphi 0, %s57
      %s59 = sphi 0, %s57
      %s60 = sphi 0, %s59
      %s74 = sphi 0, %s60
      %s78 = sphi 0, %s78
      %s80 = sphi 0, %s78
      %s81 = sphi 0, %s80
      %s95 = sphi 0, %s81
      %s99 = sphi 0, %s99
      %s101 = sphi 0, %s99
      %s102 = sphi 0, %s101
      %s116 = sphi 0, %s102
      %s120 = sphi 0, %s120
      %s122 = sphi 0, %s120
      %s123 = sphi 0, %s122
      %s137 = sphi 0, %s123
      %s141 = sphi 0, %s141
      %s143 = sphi 0, %s141
      %s144 = sphi 0, %s143
      %s158 = sphi 0, %s144
      %s162 = sphi 0, %s162
      %s164 = sphi 0, %s162
      %s165 = sphi 0, %s164
      %s179 = sphi 0, %s165
      %s183 = sphi 0, %s183
      %s185 = sphi 0, %s183
      %s186 = sphi 0, %s185
      %s200 = sphi 0, %s186
      %s204 = sphi 0, %s204
      %s206 = sphi 0, %s204
      %s207 = sphi 0, %s206
      %s221 = sphi 0, %s207
      %s227 = sphi 0, %s229
      %s230 = sphi 0, %s227
      %s231 = sphi 0, %s230
      %s247 = sphi 0, %s231
    $region4: #{tpu_custom_call.1} parent=1 // loop_header_branch
      %26 = sbr.rel (%p24) target = $region8
    $region5: #{tpu_custom_call.1} parent=1 // loop_body
      %s28 = ssub.s32 %s23, 1
      %s29 = ssub.s32 %s23, 2
      %s30 = sadd.s32 %s23, 1
      %s31 = ssub.s32 %s23, %s30
      %p32 = scmp.eq.s32.totalorder %s31, 0
      %s34 = sadd.s32 %s33, 1
      %s35 = scalar_select %p32, %s33, %s34
      %p38 = pneg %p32
      %p39 = scmp.eq.s32.totalorder %s23, 1
      %p40 = por %p38, %p39
      %p41 = scmp.ne.s32.totalorder %s33, %s36
      %p42 = scmp.eq.s32.totalorder %s23, 0
      %p43 = por %p41, %p42
      %p44 = scmp.ne.s32.totalorder %s33, %s36
      %p45 = scmp.eq.s32.totalorder %s28, 1
      %p46 = por %p44, %p45
      %p47 = scmp.ne.s32.totalorder %s36, %s37
      %p48 = scmp.eq.s32.totalorder %s28, 0
      %p49 = por %p47, %p48
      %p50 = scmp.ne.s32.totalorder %s36, %s37
      %p51 = scmp.eq.s32.totalorder %s29, 1
      %p52 = por %p50, %p51
      %p54 = scmp.ne.s32.totalorder %s37, %s53
      %p55 = scmp.eq.s32.totalorder %s29, 0
      %p56 = por %p54, %p55
      %s58 = sadd.s32 %s57, 1
      %p61 = scmp.eq.s32.totalorder %s23, 1
      %p62 = scmp.ne.s32.totalorder %s57, %s59
      %p63 = scmp.eq.s32.totalorder %s23, 0
      %p64 = por %p62, %p63
      %p65 = scmp.ne.s32.totalorder %s57, %s59
      %p66 = scmp.eq.s32.totalorder %s28, 1
      %p67 = por %p65, %p66
      %p68 = scmp.ne.s32.totalorder %s59, %s60
      %p69 = scmp.eq.s32.totalorder %s28, 0
      %p70 = por %p68, %p69
      %p71 = scmp.ne.s32.totalorder %s59, %s60
      %p72 = scmp.eq.s32.totalorder %s29, 1
      %p73 = por %p71, %p72
      %p75 = scmp.ne.s32.totalorder %s60, %s74
      %p76 = scmp.eq.s32.totalorder %s29, 0
      %p77 = por %p75, %p76
      %s79 = sadd.s32 %s78, 1
      %p82 = scmp.eq.s32.totalorder %s23, 1
      %p83 = scmp.ne.s32.totalorder %s78, %s80
      %p84 = scmp.eq.s32.totalorder %s23, 0
      %p85 = por %p83, %p84
      %p86 = scmp.ne.s32.totalorder %s78, %s80
      %p87 = scmp.eq.s32.totalorder %s28, 1
      %p88 = por %p86, %p87
      %p89 = scmp.ne.s32.totalorder %s80, %s81
      %p90 = scmp.eq.s32.totalorder %s28, 0
      %p91 = por %p89, %p90
      %p92 = scmp.ne.s32.totalorder %s80, %s81
      %p93 = scmp.eq.s32.totalorder %s29, 1
      %p94 = por %p92, %p93
      %p96 = scmp.ne.s32.totalorder %s81, %s95
      %p97 = scmp.eq.s32.totalorder %s29, 0
      %p98 = por %p96, %p97
      %s100 = sadd.s32 %s99, 1
      %p103 = scmp.eq.s32.totalorder %s23, 1
      %p104 = scmp.ne.s32.totalorder %s99, %s101
      %p105 = scmp.eq.s32.totalorder %s23, 0
      %p106 = por %p104, %p105
      %p107 = scmp.ne.s32.totalorder %s99, %s101
      %p108 = scmp.eq.s32.totalorder %s28, 1
      %p109 = por %p107, %p108
      %p110 = scmp.ne.s32.totalorder %s101, %s102
      %p111 = scmp.eq.s32.totalorder %s28, 0
      %p112 = por %p110, %p111
      %p113 = scmp.ne.s32.totalorder %s101, %s102
      %p114 = scmp.eq.s32.totalorder %s29, 1
      %p115 = por %p113, %p114
      %p117 = scmp.ne.s32.totalorder %s102, %s116
      %p118 = scmp.eq.s32.totalorder %s29, 0
      %p119 = por %p117, %p118
      %s121 = sadd.s32 %s120, 1
      %p124 = scmp.eq.s32.totalorder %s23, 1
      %p125 = scmp.ne.s32.totalorder %s120, %s122
      %p126 = scmp.eq.s32.totalorder %s23, 0
      %p127 = por %p125, %p126
      %p128 = scmp.ne.s32.totalorder %s120, %s122
      %p129 = scmp.eq.s32.totalorder %s28, 1
      %p130 = por %p128, %p129
      %p131 = scmp.ne.s32.totalorder %s122, %s123
      %p132 = scmp.eq.s32.totalorder %s28, 0
      %p133 = por %p131, %p132
      %p134 = scmp.ne.s32.totalorder %s122, %s123
      %p135 = scmp.eq.s32.totalorder %s29, 1
      %p136 = por %p134, %p135
      %p138 = scmp.ne.s32.totalorder %s123, %s137
      %p139 = scmp.eq.s32.totalorder %s29, 0
      %p140 = por %p138, %p139
      %s142 = sadd.s32 %s141, 1
      %p145 = scmp.eq.s32.totalorder %s23, 1
      %p146 = scmp.ne.s32.totalorder %s141, %s143
      %p147 = scmp.eq.s32.totalorder %s23, 0
      %p148 = por %p146, %p147
      %p149 = scmp.ne.s32.totalorder %s141, %s143
      %p150 = scmp.eq.s32.totalorder %s28, 1
      %p151 = por %p149, %p150
      %p152 = scmp.ne.s32.totalorder %s143, %s144
      %p153 = scmp.eq.s32.totalorder %s28, 0
      %p154 = por %p152, %p153
      %p155 = scmp.ne.s32.totalorder %s143, %s144
      %p156 = scmp.eq.s32.totalorder %s29, 1
      %p157 = por %p155, %p156
      %p159 = scmp.ne.s32.totalorder %s144, %s158
      %p160 = scmp.eq.s32.totalorder %s29, 0
      %p161 = por %p159, %p160
      %s163 = sadd.s32 %s162, 1
      %p166 = scmp.eq.s32.totalorder %s23, 1
      %p167 = scmp.ne.s32.totalorder %s162, %s164
      %p168 = scmp.eq.s32.totalorder %s23, 0
      %p169 = por %p167, %p168
      %p170 = scmp.ne.s32.totalorder %s162, %s164
      %p171 = scmp.eq.s32.totalorder %s28, 1
      %p172 = por %p170, %p171
      %p173 = scmp.ne.s32.totalorder %s164, %s165
      %p174 = scmp.eq.s32.totalorder %s28, 0
      %p175 = por %p173, %p174
      %p176 = scmp.ne.s32.totalorder %s164, %s165
      %p177 = scmp.eq.s32.totalorder %s29, 1
      %p178 = por %p176, %p177
      %p180 = scmp.ne.s32.totalorder %s165, %s179
      %p181 = scmp.eq.s32.totalorder %s29, 0
      %p182 = por %p180, %p181
      %s184 = sadd.s32 %s183, 1
      %p187 = scmp.eq.s32.totalorder %s23, 1
      %p188 = scmp.ne.s32.totalorder %s183, %s185
      %p189 = scmp.eq.s32.totalorder %s23, 0
      %p190 = por %p188, %p189
      %p191 = scmp.ne.s32.totalorder %s183, %s185
      %p192 = scmp.eq.s32.totalorder %s28, 1
      %p193 = por %p191, %p192
      %p194 = scmp.ne.s32.totalorder %s185, %s186
      %p195 = scmp.eq.s32.totalorder %s28, 0
      %p196 = por %p194, %p195
      %p197 = scmp.ne.s32.totalorder %s185, %s186
      %p198 = scmp.eq.s32.totalorder %s29, 1
      %p199 = por %p197, %p198
      %p201 = scmp.ne.s32.totalorder %s186, %s200
      %p202 = scmp.eq.s32.totalorder %s29, 0
      %p203 = por %p201, %p202
      %s205 = sadd.s32 %s204, 1
      %p208 = scmp.eq.s32.totalorder %s23, 1
      %p209 = scmp.ne.s32.totalorder %s204, %s206
      %p210 = scmp.eq.s32.totalorder %s23, 0
      %p211 = por %p209, %p210
      %p212 = scmp.ne.s32.totalorder %s204, %s206
      %p213 = scmp.eq.s32.totalorder %s28, 1
      %p214 = por %p212, %p213
      %p215 = scmp.ne.s32.totalorder %s206, %s207
      %p216 = scmp.eq.s32.totalorder %s28, 0
      %p217 = por %p215, %p216
      %p218 = scmp.ne.s32.totalorder %s206, %s207
      %p219 = scmp.eq.s32.totalorder %s29, 1
      %p220 = por %p218, %p219
      %p222 = scmp.ne.s32.totalorder %s207, %s221
      %p223 = scmp.eq.s32.totalorder %s29, 0
      %p224 = por %p222, %p223
      %s225 = ssub.s32 %s23, %s30
      %p226 = scmp.eq.s32.totalorder %s225, 0
      %s228 = sadd.s32 %s227, 1
      %s229 = scalar_select %p226, %s227, %s228
      %p232 = pneg %p226
      %p233 = scmp.eq.s32.totalorder %s23, 1
      %p234 = por %p232, %p233
      %p235 = scmp.ne.s32.totalorder %s227, %s230
      %p236 = scmp.eq.s32.totalorder %s23, 0
      %p237 = por %p235, %p236
      %p238 = scmp.ne.s32.totalorder %s227, %s230
      %p239 = scmp.eq.s32.totalorder %s28, 1
      %p240 = por %p238, %p239
      %p241 = scmp.ne.s32.totalorder %s230, %s231
      %p242 = scmp.eq.s32.totalorder %s28, 0
      %p243 = por %p241, %p242
      %p244 = scmp.ne.s32.totalorder %s230, %s231
      %p245 = scmp.eq.s32.totalorder %s29, 1
      %p246 = por %p244, %p245
      %p248 = scmp.ne.s32.totalorder %s231, %s247
      %p249 = scmp.eq.s32.totalorder %s29, 0
      %p250 = por %p248, %p249
      %p251 = scmp.le.s32.totalorder 1, %s23
      %p252 = scmp.lt.s32.totalorder %s23, 3
      %p253 = pnand %p251, %p252
      %p254 = pneg %p253
      // Predicated region
      $region9: #{tpu_custom_call.1} parent=5 // pred_check
        _
      $region10: #{tpu_custom_call.1} parent=5 // pred_check_branch
        %256 = sbr.rel (%p253) target = $region12
      $region11: #{tpu_custom_call.1} parent=5 // pred_region
        %s257 = ssub.s32 %s23, 1
        // Predicated region
        $region13: #{tpu_custom_call.1} parent=11 // pred_check
          %p258 = pneg %p70
        $region14: #{tpu_custom_call.1} parent=11 // pred_check_branch
          %260 = sbr.rel (%p258) target = $region16
        $region15: #{tpu_custom_call.1} parent=11 // pred_region
          %s262 = ssub.s32 7168, 7168
          %263 = vsyncadd [#allocation6], %s262
          %s264 = sshll.u32 [#allocation5], 4
          %s265 = int_to_ptr.vmem [resolvable:$true] %s264
          %270 = dma.hbm_to_vmem [thread:$0]  %s1, 7168, %s265, [#allocation6], 64, 64, 4
        $region16: #{tpu_custom_call.1} parent=11 // pred_fallthru
          _
        // Predicated region
        $region17: #{tpu_custom_call.1} parent=11 // pred_check
          %p271 = pneg %p91
        $region18: #{tpu_custom_call.1} parent=11 // pred_check_branch
          %273 = sbr.rel (%p271) target = $region20
        $region19: #{tpu_custom_call.1} parent=11 // pred_region
          _
        $region20: #{tpu_custom_call.1} parent=11 // pred_fallthru
          _
        // Predicated region
        $region21: #{tpu_custom_call.1} parent=11 // pred_check
          %p274 = pneg %p112
        $region22: #{tpu_custom_call.1} parent=11 // pred_check_branch
          %276 = sbr.rel (%p274) target = $region24
        $region23: #{tpu_custom_call.1} parent=11 // pred_region
          %s278 = ssub.s32 1024, 1024
          %279 = vsyncadd [#allocation6], %s278
          %s280 = sshll.u32 [#allocation7], 4
          %s281 = int_to_ptr.vmem [resolvable:$true] %s280
          %286 = dma.hbm_to_vmem [thread:$0]  %s3, 1024, %s281, [#allocation6], 64, 64, 4
        $region24: #{tpu_custom_call.1} parent=11 // pred_fallthru
          _
        // Predicated region
        $region25: #{tpu_custom_call.1} parent=11 // pred_check
          %p287 = pneg %p133
        $region26: #{tpu_custom_call.1} parent=11 // pred_check_branch
          %289 = sbr.rel (%p287) target = $region28
        $region27: #{tpu_custom_call.1} parent=11 // pred_region
          _
        $region28: #{tpu_custom_call.1} parent=11 // pred_fallthru
          _
        // Predicated region
        $region29: #{tpu_custom_call.1} parent=11 // pred_check
          %p290 = pneg %p154
        $region30: #{tpu_custom_call.1} parent=11 // pred_check_branch
          %292 = sbr.rel (%p290) target = $region32
        $region31: #{tpu_custom_call.1} parent=11 // pred_region
          %s294 = ssub.s32 1024, 1024
          %295 = vsyncadd [#allocation9], %s294
          %s296 = sshll.u32 [#allocation8], 4
          %s297 = int_to_ptr.vmem [resolvable:$true] %s296
          %302 = dma.hbm_to_vmem [thread:$0]  %s5, 1024, %s297, [#allocation9], 64, 64, 4
        $region32: #{tpu_custom_call.1} parent=11 // pred_fallthru
          _
        // Predicated region
        $region33: #{tpu_custom_call.1} parent=11 // pred_check
          %p303 = pneg %p175
        $region34: #{tpu_custom_call.1} parent=11 // pred_check_branch
          %305 = sbr.rel (%p303) target = $region36
        $region35: #{tpu_custom_call.1} parent=11 // pred_region
          _
        $region36: #{tpu_custom_call.1} parent=11 // pred_fallthru
          _
        // Predicated region
        $region37: #{tpu_custom_call.1} parent=11 // pred_check
          %p306 = pneg %p196
        $region38: #{tpu_custom_call.1} parent=11 // pred_check_branch
          %308 = sbr.rel (%p306) target = $region40
        $region39: #{tpu_custom_call.1} parent=11 // pred_region
          %s310 = ssub.s32 1024, 1024
          %311 = vsyncadd [#allocation9], %s310
          %s312 = sshll.u32 [#allocation10], 4
          %s313 = int_to_ptr.vmem [resolvable:$true] %s312
          %318 = dma.hbm_to_vmem [thread:$0]  %s7, 1024, %s313, [#allocation9], 64, 64, 4
        $region40: #{tpu_custom_call.1} parent=11 // pred_fallthru
          _
        // Predicated region
        $region41: #{tpu_custom_call.1} parent=11 // pred_check
          %p319 = pneg %p217
        $region42: #{tpu_custom_call.1} parent=11 // pred_check_branch
          %321 = sbr.rel (%p319) target = $region44
        $region43: #{tpu_custom_call.1} parent=11 // pred_region
          _
        $region44: #{tpu_custom_call.1} parent=11 // pred_fallthru
          _
      $region12: #{tpu_custom_call.1} parent=5 // pred_fallthru
        _
      %p322 = scmp.lt.s32.totalorder %s23, 2
      // Predicated region
      $region45: #{tpu_custom_call.1} parent=5 // pred_check
        %p323 = pneg %p322
      $region46: #{tpu_custom_call.1} parent=5 // pred_check_branch
        %325 = sbr.rel (%p323) target = $region48
      $region47: #{tpu_custom_call.1} parent=5 // pred_region
        // Predicated region
        $region49: #{tpu_custom_call.1} parent=47 // pred_check
          %p326 = pneg %p43
        $region50: #{tpu_custom_call.1} parent=47 // pred_check_branch
          %328 = sbr.rel (%p326) target = $region52
        $region51: #{tpu_custom_call.1} parent=47 // pred_region
          %s329 = sand.u32 %s33, 1
          %s330 = scalar_lea.sflag [#allocation3], %s329
          %s331 = sand.u32 %s33, 1
          %s332 = smul.addr %s331, 28
          %s333 = scalar_lea.vmem [#allocation2], %s332
          %s335 = ssub.s32 448, 448
          %336 = vsyncadd %s330, %s335
          %s337 = smul.addr %s23, 7
          %s338 = smul.addr %s337, 64
          %s339 = scalar_lea.hbm %s0, %s338
          %s341 = sshll.u32 %s333, 4
          %s342 = int_to_ptr.vmem [resolvable:$true] %s341
          %344 = dma.hbm_to_vmem [thread:$0]  %s339, 448, %s342, %s330
        $region52: #{tpu_custom_call.1} parent=47 // pred_fallthru
          _
      $region48: #{tpu_custom_call.1} parent=5 // pred_fallthru
        _
      %p345 = scmp.le.s32.totalorder 1, %s23
      %p346 = scmp.lt.s32.totalorder %s23, 3
      %p347 = pnand %p345, %p346
      %p348 = pneg %p347
      // Predicated region
      $region53: #{tpu_custom_call.1} parent=5 // pred_check
        _
      $region54: #{tpu_custom_call.1} parent=5 // pred_check_branch
        %350 = sbr.rel (%p347) target = $region56
      $region55: #{tpu_custom_call.1} parent=5 // pred_region
        %s351 = ssub.s32 %s23, 1
        %s352 = sand.u32 %s36, 1
        %s353 = scalar_lea.sflag [#allocation3], %s352
        %s354 = sand.u32 %s36, 1
        %s355 = smul.addr %s354, 28
        %s356 = scalar_lea.vmem [#allocation2], %s355
        // Predicated region
        $region57: #{tpu_custom_call.1} parent=55 // pred_check
          %p357 = pneg %p49
        $region58: #{tpu_custom_call.1} parent=55 // pred_check_branch
          %359 = sbr.rel (%p357) target = $region60
        $region59: #{tpu_custom_call.1} parent=55 // pred_region
          %360 = dma.done %s353, 448
        $region60: #{tpu_custom_call.1} parent=55 // pred_fallthru
          _
        // Predicated region
        $region61: #{tpu_custom_call.1} parent=55 // pred_check
          %p361 = pneg %p70
        $region62: #{tpu_custom_call.1} parent=55 // pred_check_branch
          %363 = sbr.rel (%p361) target = $region64
        $region63: #{tpu_custom_call.1} parent=55 // pred_region
          %364 = dma.done [#allocation6], 7168
        $region64: #{tpu_custom_call.1} parent=55 // pred_fallthru
          _
        // Predicated region
        $region65: #{tpu_custom_call.1} parent=55 // pred_check
          %p365 = pneg %p112
        $region66: #{tpu_custom_call.1} parent=55 // pred_check_branch
          %367 = sbr.rel (%p365) target = $region68
        $region67: #{tpu_custom_call.1} parent=55 // pred_region
          %368 = dma.done [#allocation6], 1024
        $region68: #{tpu_custom_call.1} parent=55 // pred_fallthru
          _
        // Predicated region
        $region69: #{tpu_custom_call.1} parent=55 // pred_check
          %p369 = pneg %p154
        $region70: #{tpu_custom_call.1} parent=55 // pred_check_branch
          %371 = sbr.rel (%p369) target = $region72
        $region71: #{tpu_custom_call.1} parent=55 // pred_region
          %372 = dma.done [#allocation9], 1024
        $region72: #{tpu_custom_call.1} parent=55 // pred_fallthru
          _
        // Predicated region
        $region73: #{tpu_custom_call.1} parent=55 // pred_check
          %p373 = pneg %p196
        $region74: #{tpu_custom_call.1} parent=55 // pred_check_branch
          %375 = sbr.rel (%p373) target = $region76
        $region75: #{tpu_custom_call.1} parent=55 // pred_region
          %376 = dma.done [#allocation9], 1024
        $region76: #{tpu_custom_call.1} parent=55 // pred_fallthru
          _
        %s377 = sand.u32 %s36, 1
        %s378 = scalar_lea.sflag [#allocation3], %s377
        %s379 = sand.u32 %s36, 1
        %s380 = smul.addr %s379, 28
        %s381 = scalar_lea.vmem [#allocation2], %s380
        %p382 = pneg %p49
        %p383 = pneg %p46
        %p384 = pneg %p70
        %p385 = pneg %p67
        %p386 = pneg %p91
        %p387 = pneg %p88
        %p388 = pneg %p112
        %p389 = pneg %p109
        %p390 = pneg %p133
        %p391 = pneg %p130
        %p392 = pneg %p154
        %p393 = pneg %p151
        %p394 = pneg %p175
        %p395 = pneg %p172
        %p396 = pneg %p196
        %p397 = pneg %p193
        %p398 = pneg %p217
        %p399 = pneg %p214
        %p400 = pneg %p243
        %p401 = pneg %p240
        %s402 = sand.u32 %s230, 1
        %s403 = scalar_lea.sflag [#allocation4], %s402
        %s404 = sand.u32 %s230, 1
        %s405 = smul.addr %s404, 8
        %s406 = scalar_lea.vmem [#allocation11], %s405
        %v408 = vld [vmem:[%s356] sm:$0xff]
        %v409 = vld [vmem:[%s356 + $0x8] sm:$0xff]
        %v410 = vld [vmem:[%s356 + $0x10] sm:$0xff]
        %v411 = vld [vmem:[%s356 + $0x18] sm:$0xf]
        %v412 = vld [vmem:[#allocation5] sm:$0xf]
        %v413 = vld [vmem:[#allocation5 + $0x4] sm:$0xf]
        %v414 = vld [vmem:[#allocation5 + $0x8] sm:$0xf]
        %v415 = vld [vmem:[#allocation5 + $0xc] sm:$0xf]
        %v416 = vld [vmem:[#allocation5 + $0x10] sm:$0xf]
        %v417 = vld [vmem:[#allocation5 + $0x14] sm:$0xf]
        %v418 = vld [vmem:[#allocation5 + $0x18] sm:$0xf]
        %v419 = vld [vmem:[#allocation5 + $0x1c] sm:$0xf]
        %v420 = vld [vmem:[#allocation5 + $0x20] sm:$0xf]
        %v421 = vld [vmem:[#allocation5 + $0x24] sm:$0xf]
        %v422 = vld [vmem:[#allocation5 + $0x28] sm:$0xf]
        %v423 = vld [vmem:[#allocation5 + $0x2c] sm:$0xf]
        %v424 = vld [vmem:[#allocation5 + $0x30] sm:$0xf]
        %v425 = vld [vmem:[#allocation5 + $0x34] sm:$0xf]
        %v426 = vld [vmem:[#allocation5 + $0x38] sm:$0xf]
        %v427 = vld [vmem:[#allocation5 + $0x3c] sm:$0xf]
        %v428 = vld [vmem:[#allocation5 + $0x40] sm:$0xf]
        %v429 = vld [vmem:[#allocation5 + $0x44] sm:$0xf]
        %v430 = vld [vmem:[#allocation5 + $0x48] sm:$0xf]
        %v431 = vld [vmem:[#allocation5 + $0x4c] sm:$0xf]
        %v432 = vld [vmem:[#allocation5 + $0x50] sm:$0xf]
        %v433 = vld [vmem:[#allocation5 + $0x54] sm:$0xf]
        %v434 = vld [vmem:[#allocation5 + $0x58] sm:$0xf]
        %v435 = vld [vmem:[#allocation5 + $0x5c] sm:$0xf]
        %v436 = vld [vmem:[#allocation5 + $0x60] sm:$0xf]
        %v437 = vld [vmem:[#allocation5 + $0x64] sm:$0xf]
        %v438 = vld [vmem:[#allocation5 + $0x68] sm:$0xf]
        %v439 = vld [vmem:[#allocation5 + $0x6c] sm:$0xf]
        %v440 = vld [vmem:[#allocation5 + $0x70] sm:$0xf]
        %v441 = vld [vmem:[#allocation5 + $0x74] sm:$0xf]
        %v442 = vld [vmem:[#allocation5 + $0x78] sm:$0xf]
        %v443 = vld [vmem:[#allocation5 + $0x7c] sm:$0xf]
        %v444 = vld [vmem:[#allocation5 + $0x80] sm:$0xf]
        %v445 = vld [vmem:[#allocation5 + $0x84] sm:$0xf]
        %v446 = vld [vmem:[#allocation5 + $0x88] sm:$0xf]
        %v447 = vld [vmem:[#allocation5 + $0x8c] sm:$0xf]
        %v448 = vld [vmem:[#allocation5 + $0x90] sm:$0xf]
        %v449 = vld [vmem:[#allocation5 + $0x94] sm:$0xf]
        %v450 = vld [vmem:[#allocation5 + $0x98] sm:$0xf]
        %v451 = vld [vmem:[#allocation5 + $0x9c] sm:$0xf]
        %v452 = vld [vmem:[#allocation5 + $0xa0] sm:$0xf]
        %v453 = vld [vmem:[#allocation5 + $0xa4] sm:$0xf]
        %v454 = vld [vmem:[#allocation5 + $0xa8] sm:$0xf]
        %v455 = vld [vmem:[#allocation5 + $0xac] sm:$0xf]
        %v456 = vld [vmem:[#allocation5 + $0xb0] sm:$0xf]
        %v457 = vld [vmem:[#allocation5 + $0xb4] sm:$0xf]
        %v458 = vld [vmem:[#allocation5 + $0xb8] sm:$0xf]
        %v459 = vld [vmem:[#allocation5 + $0xbc] sm:$0xf]
        %v460 = vld [vmem:[#allocation5 + $0xc0] sm:$0xf]
        %v461 = vld [vmem:[#allocation5 + $0xc4] sm:$0xf]
        %v462 = vld [vmem:[#allocation5 + $0xc8] sm:$0xf]
        %v463 = vld [vmem:[#allocation5 + $0xcc] sm:$0xf]
        %v464 = vld [vmem:[#allocation5 + $0xd0] sm:$0xf]
        %v465 = vld [vmem:[#allocation5 + $0xd4] sm:$0xf]
        %v466 = vld [vmem:[#allocation5 + $0xd8] sm:$0xf]
        %v467 = vld [vmem:[#allocation5 + $0xdc] sm:$0xf]
        %v468 = vld [vmem:[#allocation5 + $0xe0] sm:$0xf]
        %v469 = vld [vmem:[#allocation5 + $0xe4] sm:$0xf]
        %v470 = vld [vmem:[#allocation5 + $0xe8] sm:$0xf]
        %v471 = vld [vmem:[#allocation5 + $0xec] sm:$0xf]
        %v472 = vld [vmem:[#allocation5 + $0xf0] sm:$0xf]
        %v473 = vld [vmem:[#allocation5 + $0xf4] sm:$0xf]
        %v474 = vld [vmem:[#allocation5 + $0xf8] sm:$0xf]
        %v475 = vld [vmem:[#allocation5 + $0xfc] sm:$0xf]
        %v476 = vld [vmem:[#allocation5 + $0x100] sm:$0xf]
        %v477 = vld [vmem:[#allocation5 + $0x104] sm:$0xf]
        %v478 = vld [vmem:[#allocation5 + $0x108] sm:$0xf]
        %v479 = vld [vmem:[#allocation5 + $0x10c] sm:$0xf]
        %v480 = vld [vmem:[#allocation5 + $0x110] sm:$0xf]
        %v481 = vld [vmem:[#allocation5 + $0x114] sm:$0xf]
        %v482 = vld [vmem:[#allocation5 + $0x118] sm:$0xf]
        %v483 = vld [vmem:[#allocation5 + $0x11c] sm:$0xf]
        %v484 = vld [vmem:[#allocation5 + $0x120] sm:$0xf]
        %v485 = vld [vmem:[#allocation5 + $0x124] sm:$0xf]
        %v486 = vld [vmem:[#allocation5 + $0x128] sm:$0xf]
        %v487 = vld [vmem:[#allocation5 + $0x12c] sm:$0xf]
        %v488 = vld [vmem:[#allocation5 + $0x130] sm:$0xf]
        %v489 = vld [vmem:[#allocation5 + $0x134] sm:$0xf]
        %v490 = vld [vmem:[#allocation5 + $0x138] sm:$0xf]
        %v491 = vld [vmem:[#allocation5 + $0x13c] sm:$0xf]
        %v492 = vld [vmem:[#allocation5 + $0x140] sm:$0xf]
        %v493 = vld [vmem:[#allocation5 + $0x144] sm:$0xf]
        %v494 = vld [vmem:[#allocation5 + $0x148] sm:$0xf]
        %v495 = vld [vmem:[#allocation5 + $0x14c] sm:$0xf]
        %v496 = vld [vmem:[#allocation5 + $0x150] sm:$0xf]
        %v497 = vld [vmem:[#allocation5 + $0x154] sm:$0xf]
        %v498 = vld [vmem:[#allocation5 + $0x158] sm:$0xf]
        %v499 = vld [vmem:[#allocation5 + $0x15c] sm:$0xf]
        %v500 = vld [vmem:[#allocation5 + $0x160] sm:$0xf]
        %v501 = vld [vmem:[#allocation5 + $0x164] sm:$0xf]
        %v502 = vld [vmem:[#allocation5 + $0x168] sm:$0xf]
        %v503 = vld [vmem:[#allocation5 + $0x16c] sm:$0xf]
        %v504 = vld [vmem:[#allocation5 + $0x170] sm:$0xf]
        %v505 = vld [vmem:[#allocation5 + $0x174] sm:$0xf]
        %v506 = vld [vmem:[#allocation5 + $0x178] sm:$0xf]
        %v507 = vld [vmem:[#allocation5 + $0x17c] sm:$0xf]
        %v508 = vld [vmem:[#allocation5 + $0x180] sm:$0xf]
        %v509 = vld [vmem:[#allocation5 + $0x184] sm:$0xf]
        %v510 = vld [vmem:[#allocation5 + $0x188] sm:$0xf]
        %v511 = vld [vmem:[#allocation5 + $0x18c] sm:$0xf]
        %v512 = vld [vmem:[#allocation5 + $0x190] sm:$0xf]
        %v513 = vld [vmem:[#allocation5 + $0x194] sm:$0xf]
        %v514 = vld [vmem:[#allocation5 + $0x198] sm:$0xf]
        %v515 = vld [vmem:[#allocation5 + $0x19c] sm:$0xf]
        %v516 = vld [vmem:[#allocation5 + $0x1a0] sm:$0xf]
        %v517 = vld [vmem:[#allocation5 + $0x1a4] sm:$0xf]
        %v518 = vld [vmem:[#allocation5 + $0x1a8] sm:$0xf]
        %v519 = vld [vmem:[#allocation5 + $0x1ac] sm:$0xf]
        %v520 = vld [vmem:[#allocation5 + $0x1b0] sm:$0xf]
        %v521 = vld [vmem:[#allocation5 + $0x1b4] sm:$0xf]
        %v522 = vld [vmem:[#allocation5 + $0x1b8] sm:$0xf]
        %v523 = vld [vmem:[#allocation5 + $0x1bc] sm:$0xf]
        %v524 = vld [vmem:[%s2] sm:$0x1]
        %v526 = vlaneseq
        %v527 = vshrl.u32 %v526, 7
        %v528 = vsub.s32 0, %v527
        %v529 = vrot.slane %v524, %v528
        %v535 = vunpack.c.l.b16 %v408
        %v536 = vunpack.c.h.b16 %v408
        %v537 = vunpack.c.l.b16 %v409
        %v538 = vunpack.c.h.b16 %v409
        %v539 = vunpack.c.l.b16 %v410
        %v540 = vunpack.c.h.b16 %v410
        %v541 = vunpack.c.l.b16 %v411
        %v542 = vpack.c.b16 %v535, %v535
        %v543 = vpack.c.b16 %v536, %v536
        %v544 = vpack.c.b16 %v537, %v537
        %v545 = vpack.c.b16 %v538, %v538
        %v546 = vpack.c.b16 %v539, %v539
        %v547 = vpack.c.b16 %v540, %v540
        %v548 = vpack.c.b16 %v541, %v541
        %v668 = vunpack.c.l.b16 %v412
        %v669 = vunpack.c.l.b16 %v413
        %v670 = vunpack.c.l.b16 %v414
        %v671 = vunpack.c.l.b16 %v415
        %v672 = vunpack.c.l.b16 %v416
        %v673 = vunpack.c.l.b16 %v417
        %v674 = vunpack.c.l.b16 %v418
        %v675 = vunpack.c.l.b16 %v419
        %v676 = vunpack.c.l.b16 %v420
        %v677 = vunpack.c.l.b16 %v421
        %v678 = vunpack.c.l.b16 %v422
        %v679 = vunpack.c.l.b16 %v423
        %v680 = vunpack.c.l.b16 %v424
        %v681 = vunpack.c.l.b16 %v425
        %v682 = vunpack.c.l.b16 %v426
        %v683 = vunpack.c.l.b16 %v427
        %v684 = vunpack.c.l.b16 %v428
        %v685 = vunpack.c.l.b16 %v429
        %v686 = vunpack.c.l.b16 %v430
        %v687 = vunpack.c.l.b16 %v431
        %v688 = vunpack.c.l.b16 %v432
        %v689 = vunpack.c.l.b16 %v433
        %v690 = vunpack.c.l.b16 %v434
        %v691 = vunpack.c.l.b16 %v435
        %v692 = vunpack.c.l.b16 %v436
        %v693 = vunpack.c.l.b16 %v437
        %v694 = vunpack.c.l.b16 %v438
        %v695 = vunpack.c.l.b16 %v439
        %v696 = vunpack.c.l.b16 %v440
        %v697 = vunpack.c.l.b16 %v441
        %v698 = vunpack.c.l.b16 %v442
        %v699 = vunpack.c.l.b16 %v443
        %v700 = vunpack.c.l.b16 %v444
        %v701 = vunpack.c.l.b16 %v445
        %v702 = vunpack.c.l.b16 %v446
        %v703 = vunpack.c.l.b16 %v447
        %v704 = vunpack.c.l.b16 %v448
        %v705 = vunpack.c.l.b16 %v449
        %v706 = vunpack.c.l.b16 %v450
        %v707 = vunpack.c.l.b16 %v451
        %v708 = vunpack.c.l.b16 %v452
        %v709 = vunpack.c.l.b16 %v453
        %v710 = vunpack.c.l.b16 %v454
        %v711 = vunpack.c.l.b16 %v455
        %v712 = vunpack.c.l.b16 %v456
        %v713 = vunpack.c.l.b16 %v457
        %v714 = vunpack.c.l.b16 %v458
        %v715 = vunpack.c.l.b16 %v459
        %v716 = vunpack.c.l.b16 %v460
        %v717 = vunpack.c.l.b16 %v461
        %v718 = vunpack.c.l.b16 %v462
        %v719 = vunpack.c.l.b16 %v463
        %v720 = vunpack.c.l.b16 %v464
        %v721 = vunpack.c.l.b16 %v465
        %v722 = vunpack.c.l.b16 %v466
        %v723 = vunpack.c.l.b16 %v467
        %v724 = vunpack.c.l.b16 %v468
        %v725 = vunpack.c.l.b16 %v469
        %v726 = vunpack.c.l.b16 %v470
        %v727 = vunpack.c.l.b16 %v471
        %v728 = vunpack.c.l.b16 %v472
        %v729 = vunpack.c.l.b16 %v473
        %v730 = vunpack.c.l.b16 %v474
        %v731 = vunpack.c.l.b16 %v475
        %v732 = vunpack.c.l.b16 %v476
        %v733 = vunpack.c.l.b16 %v477
        %v734 = vunpack.c.l.b16 %v478
        %v735 = vunpack.c.l.b16 %v479
        %v736 = vunpack.c.l.b16 %v480
        %v737 = vunpack.c.l.b16 %v481
        %v738 = vunpack.c.l.b16 %v482
        %v739 = vunpack.c.l.b16 %v483
        %v740 = vunpack.c.l.b16 %v484
        %v741 = vunpack.c.l.b16 %v485
        %v742 = vunpack.c.l.b16 %v486
        %v743 = vunpack.c.l.b16 %v487
        %v744 = vunpack.c.l.b16 %v488
        %v745 = vunpack.c.l.b16 %v489
        %v746 = vunpack.c.l.b16 %v490
        %v747 = vunpack.c.l.b16 %v491
        %v748 = vunpack.c.l.b16 %v492
        %v749 = vunpack.c.l.b16 %v493
        %v750 = vunpack.c.l.b16 %v494
        %v751 = vunpack.c.l.b16 %v495
        %v752 = vunpack.c.l.b16 %v496
        %v753 = vunpack.c.l.b16 %v497
        %v754 = vunpack.c.l.b16 %v498
        %v755 = vunpack.c.l.b16 %v499
        %v756 = vunpack.c.l.b16 %v500
        %v757 = vunpack.c.l.b16 %v501
        %v758 = vunpack.c.l.b16 %v502
        %v759 = vunpack.c.l.b16 %v503
        %v760 = vunpack.c.l.b16 %v504
        %v761 = vunpack.c.l.b16 %v505
        %v762 = vunpack.c.l.b16 %v506
        %v763 = vunpack.c.l.b16 %v507
        %v764 = vunpack.c.l.b16 %v508
        %v765 = vunpack.c.l.b16 %v509
        %v766 = vunpack.c.l.b16 %v510
        %v767 = vunpack.c.l.b16 %v511
        %v768 = vunpack.c.l.b16 %v512
        %v769 = vunpack.c.l.b16 %v513
        %v770 = vunpack.c.l.b16 %v514
        %v771 = vunpack.c.l.b16 %v515
        %v772 = vunpack.c.l.b16 %v516
        %v773 = vunpack.c.l.b16 %v517
        %v774 = vunpack.c.l.b16 %v518
        %v775 = vunpack.c.l.b16 %v519
        %v776 = vunpack.c.l.b16 %v520
        %v777 = vunpack.c.l.b16 %v521
        %v778 = vunpack.c.l.b16 %v522
        %v779 = vunpack.c.l.b16 %v523
        %v780 = vpack.c.b16 %v669, %v668
        %v781 = vpack.c.b16 %v671, %v670
        %v782 = vpack.c.b16 %v673, %v672
        %v783 = vpack.c.b16 %v675, %v674
        %v784 = vpack.c.b16 %v677, %v676
        %v785 = vpack.c.b16 %v679, %v678
        %v786 = vpack.c.b16 %v681, %v680
        %v787 = vpack.c.b16 %v683, %v682
        %v788 = vpack.c.b16 %v685, %v684
        %v789 = vpack.c.b16 %v687, %v686
        %v790 = vpack.c.b16 %v689, %v688
        %v791 = vpack.c.b16 %v691, %v690
        %v792 = vpack.c.b16 %v693, %v692
        %v793 = vpack.c.b16 %v695, %v694
        %v794 = vpack.c.b16 %v697, %v696
        %v795 = vpack.c.b16 %v699, %v698
        %v796 = vpack.c.b16 %v701, %v700
        %v797 = vpack.c.b16 %v703, %v702
        %v798 = vpack.c.b16 %v705, %v704
        %v799 = vpack.c.b16 %v707, %v706
        %v800 = vpack.c.b16 %v709, %v708
        %v801 = vpack.c.b16 %v711, %v710
        %v802 = vpack.c.b16 %v713, %v712
        %v803 = vpack.c.b16 %v715, %v714
        %v804 = vpack.c.b16 %v717, %v716
        %v805 = vpack.c.b16 %v719, %v718
        %v806 = vpack.c.b16 %v721, %v720
        %v807 = vpack.c.b16 %v723, %v722
        %v808 = vpack.c.b16 %v725, %v724
        %v809 = vpack.c.b16 %v727, %v726
        %v810 = vpack.c.b16 %v729, %v728
        %v811 = vpack.c.b16 %v731, %v730
        %v812 = vpack.c.b16 %v733, %v732
        %v813 = vpack.c.b16 %v735, %v734
        %v814 = vpack.c.b16 %v737, %v736
        %v815 = vpack.c.b16 %v739, %v738
        %v816 = vpack.c.b16 %v741, %v740
        %v817 = vpack.c.b16 %v743, %v742
        %v818 = vpack.c.b16 %v745, %v744
        %v819 = vpack.c.b16 %v747, %v746
        %v820 = vpack.c.b16 %v749, %v748
        %v821 = vpack.c.b16 %v751, %v750
        %v822 = vpack.c.b16 %v753, %v752
        %v823 = vpack.c.b16 %v755, %v754
        %v824 = vpack.c.b16 %v757, %v756
        %v825 = vpack.c.b16 %v759, %v758
        %v826 = vpack.c.b16 %v761, %v760
        %v827 = vpack.c.b16 %v763, %v762
        %v828 = vpack.c.b16 %v765, %v764
        %v829 = vpack.c.b16 %v767, %v766
        %v830 = vpack.c.b16 %v769, %v768
        %v831 = vpack.c.b16 %v771, %v770
        %v832 = vpack.c.b16 %v773, %v772
        %v833 = vpack.c.b16 %v775, %v774
        %v834 = vpack.c.b16 %v777, %v776
        %v835 = vpack.c.b16 %v779, %v778
        %892 = vmatprep.subr.bf16.mxu0 0
        %893 = vmatpush1.bf16.msra.mxu0 %v780
        %894 = vmatprep.subr.bf16.mxu0 0
        %895 = vmatpush1.bf16.msra.mxu0 %v781
        %896 = vmatprep.subr.bf16.mxu0 0
        %897 = vmatpush1.bf16.msra.mxu0 %v782
        %898 = vmatprep.subr.bf16.mxu0 0
        %899 = vmatpush1.bf16.msra.mxu0 %v783
        %900 = vmatprep.subr.bf16.mxu0 0
        %901 = vmatpush1.bf16.msra.mxu0 %v784
        %902 = vmatprep.subr.bf16.mxu0 0
        %903 = vmatpush1.bf16.msra.mxu0 %v785
        %904 = vmatprep.subr.bf16.mxu0 0
        %905 = vmatpush1.bf16.msra.mxu0 %v786
        %906 = vmatprep.subr.bf16.mxu0 0
        %907 = vmatpush1.bf16.msra.mxu0 %v787
        %908 = vmatprep.subr.bf16.mxu0 0
        %909 = vmatpush1.bf16.msra.mxu0 %v788
        %910 = vmatprep.subr.bf16.mxu0 0
        %911 = vmatpush1.bf16.msra.mxu0 %v789
        %912 = vmatprep.subr.bf16.mxu0 0
        %913 = vmatpush1.bf16.msra.mxu0 %v790
        %914 = vmatprep.subr.bf16.mxu0 0
        %915 = vmatpush1.bf16.msra.mxu0 %v791
        %916 = vmatprep.subr.bf16.mxu0 0
        %917 = vmatpush1.bf16.msra.mxu0 %v792
        %918 = vmatprep.subr.bf16.mxu0 0
        %919 = vmatpush1.bf16.msra.mxu0 %v793
        %920 = vmatprep.subr.bf16.mxu0 0
        %921 = vmatpush1.bf16.msra.mxu0 %v794
        %922 = vmatprep.subr.bf16.mxu0 0
        %923 = vmatpush1.bf16.msra.mxu0 %v795
        %924 = vmatprep.mubr.bf16.mxu0 %v543
        %925 = vmatmul.mubr.bf16.gmra.mrb[0].mxu0 %v542
        %v926 = vpop.f32.mrb[0].mxu0
        %v927 = vadd.f32 %v529, %v926
        %v928 = vpop.f32.mrb[0].mxu0
        %v929 = vpop.f32.mrb[0].mxu0
        %v930 = vpop.f32.mrb[0].mxu0
        %931 = vdwg.mxu0
        %932 = vmatprep.subr.bf16.mxu0 0
        %933 = vmatpush1.bf16.msra.mxu0 %v796
        %934 = vmatprep.subr.bf16.mxu0 0
        %935 = vmatpush1.bf16.msra.mxu0 %v797
        %936 = vmatprep.subr.bf16.mxu0 0
        %937 = vmatpush1.bf16.msra.mxu0 %v798
        %938 = vmatprep.subr.bf16.mxu0 0
        %939 = vmatpush1.bf16.msra.mxu0 %v799
        %940 = vmatprep.subr.bf16.mxu0 0
        %941 = vmatpush1.bf16.msra.mxu0 %v800
        %942 = vmatprep.subr.bf16.mxu0 0
        %943 = vmatpush1.bf16.msra.mxu0 %v801
        %944 = vmatprep.subr.bf16.mxu0 0
        %945 = vmatpush1.bf16.msra.mxu0 %v802
        %946 = vmatprep.subr.bf16.mxu0 0
        %947 = vmatpush1.bf16.msra.mxu0 %v803
        %948 = vmatprep.subr.bf16.mxu0 0
        %949 = vmatpush1.bf16.msra.mxu0 %v804
        %950 = vmatprep.subr.bf16.mxu0 0
        %951 = vmatpush1.bf16.msra.mxu0 %v805
        %952 = vmatprep.subr.bf16.mxu0 0
        %953 = vmatpush1.bf16.msra.mxu0 %v806
        %954 = vmatprep.subr.bf16.mxu0 0
        %955 = vmatpush1.bf16.msra.mxu0 %v807
        %956 = vmatprep.subr.bf16.mxu0 0
        %957 = vmatpush1.bf16.msra.mxu0 %v808
        %958 = vmatprep.subr.bf16.mxu0 0
        %959 = vmatpush1.bf16.msra.mxu0 %v809
        %960 = vmatprep.subr.bf16.mxu0 0
        %961 = vmatpush1.bf16.msra.mxu0 %v810
        %962 = vmatprep.subr.bf16.mxu0 0
        %963 = vmatpush1.bf16.msra.mxu0 %v811
        %964 = vmatprep.mubr.bf16.mxu0 %v545
        %965 = vmatmul.mubr.bf16.gmra.mrb[0].mxu0 %v544
        %v966 = vpop.f32.mrb[0].mxu0
        %v967 = vadd.f32 %v927, %v966
        %v968 = vpop.f32.mrb[0].mxu0
        %v969 = vpop.f32.mrb[0].mxu0
        %v970 = vpop.f32.mrb[0].mxu0
        %971 = vdwg.mxu0
        %972 = vmatprep.subr.bf16.mxu0 0
        %973 = vmatpush1.bf16.msra.mxu0 %v812
        %974 = vmatprep.subr.bf16.mxu0 0
        %975 = vmatpush1.bf16.msra.mxu0 %v813
        %976 = vmatprep.subr.bf16.mxu0 0
        %977 = vmatpush1.bf16.msra.mxu0 %v814
        %978 = vmatprep.subr.bf16.mxu0 0
        %979 = vmatpush1.bf16.msra.mxu0 %v815
        %980 = vmatprep.subr.bf16.mxu0 0
        %981 = vmatpush1.bf16.msra.mxu0 %v816
        %982 = vmatprep.subr.bf16.mxu0 0
        %983 = vmatpush1.bf16.msra.mxu0 %v817
        %984 = vmatprep.subr.bf16.mxu0 0
        %985 = vmatpush1.bf16.msra.mxu0 %v818
        %986 = vmatprep.subr.bf16.mxu0 0
        %987 = vmatpush1.bf16.msra.mxu0 %v819
        %988 = vmatprep.subr.bf16.mxu0 0
        %989 = vmatpush1.bf16.msra.mxu0 %v820
        %990 = vmatprep.subr.bf16.mxu0 0
        %991 = vmatpush1.bf16.msra.mxu0 %v821
        %992 = vmatprep.subr.bf16.mxu0 0
        %993 = vmatpush1.bf16.msra.mxu0 %v822
        %994 = vmatprep.subr.bf16.mxu0 0
        %995 = vmatpush1.bf16.msra.mxu0 %v823
        %996 = vmatprep.subr.bf16.mxu0 0
        %997 = vmatpush1.bf16.msra.mxu0 %v824
        %998 = vmatprep.subr.bf16.mxu0 0
        %999 = vmatpush1.bf16.msra.mxu0 %v825
        %1000 = vmatprep.subr.bf16.mxu0 0
        %1001 = vmatpush1.bf16.msra.mxu0 %v826
        %1002 = vmatprep.subr.bf16.mxu0 0
        %1003 = vmatpush1.bf16.msra.mxu0 %v827
        %1004 = vmatprep.mubr.bf16.mxu0 %v547
        %1005 = vmatmul.mubr.bf16.gmra.mrb[0].mxu0 %v546
        %v1006 = vpop.f32.mrb[0].mxu0
        %v1007 = vadd.f32 %v967, %v1006
        %v1008 = vpop.f32.mrb[0].mxu0
        %v1009 = vpop.f32.mrb[0].mxu0
        %v1010 = vpop.f32.mrb[0].mxu0
        %1011 = vdwg.mxu0
        %1012 = vmatprep.subr.bf16.mxu0 0
        %1013 = vmatpush1.bf16.msra.mxu0 %v828
        %1014 = vmatprep.subr.bf16.mxu0 0
        %1015 = vmatpush1.bf16.msra.mxu0 %v829
        %1016 = vmatprep.subr.bf16.mxu0 0
        %1017 = vmatpush1.bf16.msra.mxu0 %v830
        %1018 = vmatprep.subr.bf16.mxu0 0
        %1019 = vmatpush1.bf16.msra.mxu0 %v831
        %1020 = vmatprep.subr.bf16.mxu0 0
        %1021 = vmatpush1.bf16.msra.mxu0 %v832
        %1022 = vmatprep.subr.bf16.mxu0 0
        %1023 = vmatpush1.bf16.msra.mxu0 %v833
        %1024 = vmatprep.subr.bf16.mxu0 0
        %1025 = vmatpush1.bf16.msra.mxu0 %v834
        %1026 = vmatprep.subr.bf16.mxu0 0
        %1027 = vmatpush1.bf16.msra.mxu0 %v835
        %1028 = vmatprep.subr.bf16.mxu0 0
        %1029 = vmatpush1.bf16.msra.mxu0 0
        %1030 = vmatprep.subr.bf16.mxu0 0
        %1031 = vmatpush1.bf16.msra.mxu0 0
        %1032 = vmatprep.subr.bf16.mxu0 0
        %1033 = vmatpush1.bf16.msra.mxu0 0
        %1034 = vmatprep.subr.bf16.mxu0 0
        %1035 = vmatpush1.bf16.msra.mxu0 0
        %1036 = vmatprep.subr.bf16.mxu0 0
        %1037 = vmatpush1.bf16.msra.mxu0 0
        %1038 = vmatprep.subr.bf16.mxu0 0
        %1039 = vmatpush1.bf16.msra.mxu0 0
        %1040 = vmatprep.subr.bf16.mxu0 0
        %1041 = vmatpush1.bf16.msra.mxu0 0
        %1042 = vmatprep.subr.bf16.mxu0 0
        %1043 = vmatpush1.bf16.msra.mxu0 0
        %1044 = vmatprep.mubr.bf16.mxu0 0
        %1045 = vmatmul.mubr.bf16.gmra.mrb[0].mxu0 %v548
        %v1046 = vpop.f32.mrb[0].mxu0
        %v1047 = vadd.f32 %v1007, %v1046
        %v1048 = vpop.f32.mrb[0].mxu0
        %v1049 = vpop.f32.mrb[0].mxu0
        %v1050 = vpop.f32.mrb[0].mxu0
        %1051 = vdwg.mxu0
        %v1052 = vmax.f32 %v1047, 0.0
        %v1053 = vpack.c.bf16 %v1052, %v1052
        %v1054 = vld [vmem:[#allocation7] sm:$0xf]
        %v1055 = vld [vmem:[#allocation7 + $0x4] sm:$0xf]
        %v1056 = vld [vmem:[#allocation7 + $0x8] sm:$0xf]
        %v1057 = vld [vmem:[#allocation7 + $0xc] sm:$0xf]
        %v1058 = vld [vmem:[#allocation7 + $0x10] sm:$0xf]
        %v1059 = vld [vmem:[#allocation7 + $0x14] sm:$0xf]
        %v1060 = vld [vmem:[#allocation7 + $0x18] sm:$0xf]
        %v1061 = vld [vmem:[#allocation7 + $0x1c] sm:$0xf]
        %v1062 = vld [vmem:[#allocation7 + $0x20] sm:$0xf]
        %v1063 = vld [vmem:[#allocation7 + $0x24] sm:$0xf]
        %v1064 = vld [vmem:[#allocation7 + $0x28] sm:$0xf]
        %v1065 = vld [vmem:[#allocation7 + $0x2c] sm:$0xf]
        %v1066 = vld [vmem:[#allocation7 + $0x30] sm:$0xf]
        %v1067 = vld [vmem:[#allocation7 + $0x34] sm:$0xf]
        %v1068 = vld [vmem:[#allocation7 + $0x38] sm:$0xf]
        %v1069 = vld [vmem:[#allocation7 + $0x3c] sm:$0xf]
        %v1070 = vld [vmem:[%s4] sm:$0x1]
        %v1072 = vlaneseq
        %v1073 = vshrl.u32 %v1072, 7
        %v1074 = vsub.s32 0, %v1073
        %v1075 = vrot.slane %v1070, %v1074
        %v1093 = vunpack.c.l.b16 %v1054
        %v1094 = vunpack.c.l.b16 %v1055
        %v1095 = vunpack.c.l.b16 %v1056
        %v1096 = vunpack.c.l.b16 %v1057
        %v1097 = vunpack.c.l.b16 %v1058
        %v1098 = vunpack.c.l.b16 %v1059
        %v1099 = vunpack.c.l.b16 %v1060
        %v1100 = vunpack.c.l.b16 %v1061
        %v1101 = vunpack.c.l.b16 %v1062
        %v1102 = vunpack.c.l.b16 %v1063
        %v1103 = vunpack.c.l.b16 %v1064
        %v1104 = vunpack.c.l.b16 %v1065
        %v1105 = vunpack.c.l.b16 %v1066
        %v1106 = vunpack.c.l.b16 %v1067
        %v1107 = vunpack.c.l.b16 %v1068
        %v1108 = vunpack.c.l.b16 %v1069
        %v1109 = vpack.c.b16 %v1094, %v1093
        %v1110 = vpack.c.b16 %v1096, %v1095
        %v1111 = vpack.c.b16 %v1098, %v1097
        %v1112 = vpack.c.b16 %v1100, %v1099
        %v1113 = vpack.c.b16 %v1102, %v1101
        %v1114 = vpack.c.b16 %v1104, %v1103
        %v1115 = vpack.c.b16 %v1106, %v1105
        %v1116 = vpack.c.b16 %v1108, %v1107
        %1125 = vmatprep.subr.bf16.mxu0 0
        %1126 = vmatpush1.bf16.msra.mxu0 %v1109
        %1127 = vmatprep.subr.bf16.mxu0 0
        %1128 = vmatpush1.bf16.msra.mxu0 %v1110
        %1129 = vmatprep.subr.bf16.mxu0 0
        %1130 = vmatpush1.bf16.msra.mxu0 %v1111
        %1131 = vmatprep.subr.bf16.mxu0 0
        %1132 = vmatpush1.bf16.msra.mxu0 %v1112
        %1133 = vmatprep.subr.bf16.mxu0 0
        %1134 = vmatpush1.bf16.msra.mxu0 %v1113
        %1135 = vmatprep.subr.bf16.mxu0 0
        %1136 = vmatpush1.bf16.msra.mxu0 %v1114
        %1137 = vmatprep.subr.bf16.mxu0 0
        %1138 = vmatpush1.bf16.msra.mxu0 %v1115
        %1139 = vmatprep.subr.bf16.mxu0 0
        %1140 = vmatpush1.bf16.msra.mxu0 %v1116
        %1141 = vmatprep.subr.bf16.mxu0 0
        %1142 = vmatpush1.bf16.msra.mxu0 0
        %1143 = vmatprep.subr.bf16.mxu0 0
        %1144 = vmatpush1.bf16.msra.mxu0 0
        %1145 = vmatprep.subr.bf16.mxu0 0
        %1146 = vmatpush1.bf16.msra.mxu0 0
        %1147 = vmatprep.subr.bf16.mxu0 0
        %1148 = vmatpush1.bf16.msra.mxu0 0
        %1149 = vmatprep.subr.bf16.mxu0 0
        %1150 = vmatpush1.bf16.msra.mxu0 0
        %1151 = vmatprep.subr.bf16.mxu0 0
        %1152 = vmatpush1.bf16.msra.mxu0 0
        %1153 = vmatprep.subr.bf16.mxu0 0
        %1154 = vmatpush1.bf16.msra.mxu0 0
        %1155 = vmatprep.subr.bf16.mxu0 0
        %1156 = vmatpush1.bf16.msra.mxu0 0
        %1157 = vmatprep.mubr.bf16.mxu0 0
        %1158 = vmatmul.mubr.bf16.gmra.mrb[0].mxu0 %v1053
        %v1159 = vpop.f32.mrb[0].mxu0
        %v1160 = vadd.f32 %v1075, %v1159
        %v1161 = vpop.f32.mrb[0].mxu0
        %v1162 = vpop.f32.mrb[0].mxu0
        %v1163 = vpop.f32.mrb[0].mxu0
        %1164 = vdwg.mxu0
        %v1165 = vmax.f32 %v1160, 0.0
        %v1166 = vpack.c.bf16 %v1165, %v1165
        %v1167 = vld [vmem:[#allocation8] sm:$0xf]
        %v1168 = vld [vmem:[#allocation8 + $0x4] sm:$0xf]
        %v1169 = vld [vmem:[#allocation8 + $0x8] sm:$0xf]
        %v1170 = vld [vmem:[#allocation8 + $0xc] sm:$0xf]
        %v1171 = vld [vmem:[#allocation8 + $0x10] sm:$0xf]
        %v1172 = vld [vmem:[#allocation8 + $0x14] sm:$0xf]
        %v1173 = vld [vmem:[#allocation8 + $0x18] sm:$0xf]
        %v1174 = vld [vmem:[#allocation8 + $0x1c] sm:$0xf]
        %v1175 = vld [vmem:[#allocation8 + $0x20] sm:$0xf]
        %v1176 = vld [vmem:[#allocation8 + $0x24] sm:$0xf]
        %v1177 = vld [vmem:[#allocation8 + $0x28] sm:$0xf]
        %v1178 = vld [vmem:[#allocation8 + $0x2c] sm:$0xf]
        %v1179 = vld [vmem:[#allocation8 + $0x30] sm:$0xf]
        %v1180 = vld [vmem:[#allocation8 + $0x34] sm:$0xf]
        %v1181 = vld [vmem:[#allocation8 + $0x38] sm:$0xf]
        %v1182 = vld [vmem:[#allocation8 + $0x3c] sm:$0xf]
        %v1183 = vld [vmem:[%s6] sm:$0x1]
        %v1185 = vlaneseq
        %v1186 = vshrl.u32 %v1185, 7
        %v1187 = vsub.s32 0, %v1186
        %v1188 = vrot.slane %v1183, %v1187
        %v1206 = vunpack.c.l.b16 %v1167
        %v1207 = vunpack.c.l.b16 %v1168
        %v1208 = vunpack.c.l.b16 %v1169
        %v1209 = vunpack.c.l.b16 %v1170
        %v1210 = vunpack.c.l.b16 %v1171
        %v1211 = vunpack.c.l.b16 %v1172
        %v1212 = vunpack.c.l.b16 %v1173
        %v1213 = vunpack.c.l.b16 %v1174
        %v1214 = vunpack.c.l.b16 %v1175
        %v1215 = vunpack.c.l.b16 %v1176
        %v1216 = vunpack.c.l.b16 %v1177
        %v1217 = vunpack.c.l.b16 %v1178
        %v1218 = vunpack.c.l.b16 %v1179
        %v1219 = vunpack.c.l.b16 %v1180
        %v1220 = vunpack.c.l.b16 %v1181
        %v1221 = vunpack.c.l.b16 %v1182
        %v1222 = vpack.c.b16 %v1207, %v1206
        %v1223 = vpack.c.b16 %v1209, %v1208
        %v1224 = vpack.c.b16 %v1211, %v1210
        %v1225 = vpack.c.b16 %v1213, %v1212
        %v1226 = vpack.c.b16 %v1215, %v1214
        %v1227 = vpack.c.b16 %v1217, %v1216
        %v1228 = vpack.c.b16 %v1219, %v1218
        %v1229 = vpack.c.b16 %v1221, %v1220
        %1238 = vmatprep.subr.bf16.mxu0 0
        %1239 = vmatpush1.bf16.msra.mxu0 %v1222
        %1240 = vmatprep.subr.bf16.mxu0 0
        %1241 = vmatpush1.bf16.msra.mxu0 %v1223
        %1242 = vmatprep.subr.bf16.mxu0 0
        %1243 = vmatpush1.bf16.msra.mxu0 %v1224
        %1244 = vmatprep.subr.bf16.mxu0 0
        %1245 = vmatpush1.bf16.msra.mxu0 %v1225
        %1246 = vmatprep.subr.bf16.mxu0 0
        %1247 = vmatpush1.bf16.msra.mxu0 %v1226
        %1248 = vmatprep.subr.bf16.mxu0 0
        %1249 = vmatpush1.bf16.msra.mxu0 %v1227
        %1250 = vmatprep.subr.bf16.mxu0 0
        %1251 = vmatpush1.bf16.msra.mxu0 %v1228
        %1252 = vmatprep.subr.bf16.mxu0 0
        %1253 = vmatpush1.bf16.msra.mxu0 %v1229
        %1254 = vmatprep.subr.bf16.mxu0 0
        %1255 = vmatpush1.bf16.msra.mxu0 0
        %1256 = vmatprep.subr.bf16.mxu0 0
        %1257 = vmatpush1.bf16.msra.mxu0 0
        %1258 = vmatprep.subr.bf16.mxu0 0
        %1259 = vmatpush1.bf16.msra.mxu0 0
        %1260 = vmatprep.subr.bf16.mxu0 0
        %1261 = vmatpush1.bf16.msra.mxu0 0
        %1262 = vmatprep.subr.bf16.mxu0 0
        %1263 = vmatpush1.bf16.msra.mxu0 0
        %1264 = vmatprep.subr.bf16.mxu0 0
        %1265 = vmatpush1.bf16.msra.mxu0 0
        %1266 = vmatprep.subr.bf16.mxu0 0
        %1267 = vmatpush1.bf16.msra.mxu0 0
        %1268 = vmatprep.subr.bf16.mxu0 0
        %1269 = vmatpush1.bf16.msra.mxu0 0
        %1270 = vmatprep.mubr.bf16.mxu0 0
        %1271 = vmatmul.mubr.bf16.gmra.mrb[0].mxu0 %v1166
        %v1272 = vpop.f32.mrb[0].mxu0
        %v1273 = vadd.f32 %v1188, %v1272
        %v1274 = vpop.f32.mrb[0].mxu0
        %v1275 = vpop.f32.mrb[0].mxu0
        %v1276 = vpop.f32.mrb[0].mxu0
        %1277 = vdwg.mxu0
        %v1278 = vmax.f32 %v1273, 0.0
        %v1279 = vpack.c.bf16 %v1278, %v1278
        %v1280 = vld [vmem:[#allocation10] sm:$0xf]
        %v1281 = vld [vmem:[#allocation10 + $0x4] sm:$0xf]
        %v1282 = vld [vmem:[#allocation10 + $0x8] sm:$0xf]
        %v1283 = vld [vmem:[#allocation10 + $0xc] sm:$0xf]
        %v1284 = vld [vmem:[#allocation10 + $0x10] sm:$0xf]
        %v1285 = vld [vmem:[#allocation10 + $0x14] sm:$0xf]
        %v1286 = vld [vmem:[#allocation10 + $0x18] sm:$0xf]
        %v1287 = vld [vmem:[#allocation10 + $0x1c] sm:$0xf]
        %v1288 = vld [vmem:[#allocation10 + $0x20] sm:$0xf]
        %v1289 = vld [vmem:[#allocation10 + $0x24] sm:$0xf]
        %v1290 = vld [vmem:[#allocation10 + $0x28] sm:$0xf]
        %v1291 = vld [vmem:[#allocation10 + $0x2c] sm:$0xf]
        %v1292 = vld [vmem:[#allocation10 + $0x30] sm:$0xf]
        %v1293 = vld [vmem:[#allocation10 + $0x34] sm:$0xf]
        %v1294 = vld [vmem:[#allocation10 + $0x38] sm:$0xf]
        %v1295 = vld [vmem:[#allocation10 + $0x3c] sm:$0xf]
        %v1296 = vld [vmem:[%s8] sm:$0x1]
        %v1298 = vlaneseq
        %v1299 = vshrl.u32 %v1298, 7
        %v1300 = vsub.s32 0, %v1299
        %v1301 = vrot.slane %v1296, %v1300
        %v1319 = vunpack.c.l.b16 %v1280
        %v1320 = vunpack.c.l.b16 %v1281
        %v1321 = vunpack.c.l.b16 %v1282
        %v1322 = vunpack.c.l.b16 %v1283
        %v1323 = vunpack.c.l.b16 %v1284
        %v1324 = vunpack.c.l.b16 %v1285
        %v1325 = vunpack.c.l.b16 %v1286
        %v1326 = vunpack.c.l.b16 %v1287
        %v1327 = vunpack.c.l.b16 %v1288
        %v1328 = vunpack.c.l.b16 %v1289
        %v1329 = vunpack.c.l.b16 %v1290
        %v1330 = vunpack.c.l.b16 %v1291
        %v1331 = vunpack.c.l.b16 %v1292
        %v1332 = vunpack.c.l.b16 %v1293
        %v1333 = vunpack.c.l.b16 %v1294
        %v1334 = vunpack.c.l.b16 %v1295
        %v1335 = vpack.c.b16 %v1320, %v1319
        %v1336 = vpack.c.b16 %v1322, %v1321
        %v1337 = vpack.c.b16 %v1324, %v1323
        %v1338 = vpack.c.b16 %v1326, %v1325
        %v1339 = vpack.c.b16 %v1328, %v1327
        %v1340 = vpack.c.b16 %v1330, %v1329
        %v1341 = vpack.c.b16 %v1332, %v1331
        %v1342 = vpack.c.b16 %v1334, %v1333
        %1351 = vmatprep.subr.bf16.mxu0 0
        %1352 = vmatpush1.bf16.msra.mxu0 %v1335
        %1353 = vmatprep.subr.bf16.mxu0 0
        %1354 = vmatpush1.bf16.msra.mxu0 %v1336
        %1355 = vmatprep.subr.bf16.mxu0 0
        %1356 = vmatpush1.bf16.msra.mxu0 %v1337
        %1357 = vmatprep.subr.bf16.mxu0 0
        %1358 = vmatpush1.bf16.msra.mxu0 %v1338
        %1359 = vmatprep.subr.bf16.mxu0 0
        %1360 = vmatpush1.bf16.msra.mxu0 %v1339
        %1361 = vmatprep.subr.bf16.mxu0 0
        %1362 = vmatpush1.bf16.msra.mxu0 %v1340
        %1363 = vmatprep.subr.bf16.mxu0 0
        %1364 = vmatpush1.bf16.msra.mxu0 %v1341
        %1365 = vmatprep.subr.bf16.mxu0 0
        %1366 = vmatpush1.bf16.msra.mxu0 %v1342
        %1367 = vmatprep.subr.bf16.mxu0 0
        %1368 = vmatpush1.bf16.msra.mxu0 0
        %1369 = vmatprep.subr.bf16.mxu0 0
        %1370 = vmatpush1.bf16.msra.mxu0 0
        %1371 = vmatprep.subr.bf16.mxu0 0
        %1372 = vmatpush1.bf16.msra.mxu0 0
        %1373 = vmatprep.subr.bf16.mxu0 0
        %1374 = vmatpush1.bf16.msra.mxu0 0
        %1375 = vmatprep.subr.bf16.mxu0 0
        %1376 = vmatpush1.bf16.msra.mxu0 0
        %1377 = vmatprep.subr.bf16.mxu0 0
        %1378 = vmatpush1.bf16.msra.mxu0 0
        %1379 = vmatprep.subr.bf16.mxu0 0
        %1380 = vmatpush1.bf16.msra.mxu0 0
        %1381 = vmatprep.subr.bf16.mxu0 0
        %1382 = vmatpush1.bf16.msra.mxu0 0
        %1383 = vmatprep.mubr.bf16.mxu0 0
        %1384 = vmatmul.mubr.bf16.gmra.mrb[0].mxu0 %v1279
        %v1385 = vpop.f32.mrb[0].mxu0
        %v1386 = vadd.f32 %v1301, %v1385
        %v1387 = vpop.f32.mrb[0].mxu0
        %v1388 = vpop.f32.mrb[0].mxu0
        %v1389 = vpop.f32.mrb[0].mxu0
        %1390 = vdwg.mxu0
        %1391 = vst [vmem:[%s406] sm:$0xff] %v1386
        %s1392 = sand.u32 %s230, 1
        %s1393 = scalar_lea.sflag [#allocation4], %s1392
        %s1394 = sand.u32 %s230, 1
        %s1395 = smul.addr %s1394, 8
        %s1396 = scalar_lea.vmem [#allocation11], %s1395
        // Predicated region
        $region77: #{tpu_custom_call.1} parent=55 // pred_check
          %p1397 = pneg %p240
        $region78: #{tpu_custom_call.1} parent=55 // pred_check_branch
          %1399 = sbr.rel (%p1397) target = $region80
        $region79: #{tpu_custom_call.1} parent=55 // pred_region
          %s1401 = ssub.s32 128, 128
          %1402 = vsyncadd %s1393, %s1401
          %s1403 = smul.addr %s28, 128
          %s1404 = scalar_lea.hbm %s9, %s1403
          %s1406 = sshll.u32 %s1396, 4
          %s1407 = int_to_ptr.vmem [resolvable:$true] %s1406
          %1409 = dma.vmem_to_hbm [thread:$0]  %s1407, 128, %s1404, %s1393
        $region80: #{tpu_custom_call.1} parent=55 // pred_fallthru
          _
      $region56: #{tpu_custom_call.1} parent=5 // pred_fallthru
        _
      %p1410 = scmp.le.s32.totalorder 2, %s23
      // Predicated region
      $region81: #{tpu_custom_call.1} parent=5 // pred_check
        %p1411 = pneg %p1410
      $region82: #{tpu_custom_call.1} parent=5 // pred_check_branch
        %1413 = sbr.rel (%p1411) target = $region84
      $region83: #{tpu_custom_call.1} parent=5 // pred_region
        %s1414 = ssub.s32 %s23, 2
        // Predicated region
        $region85: #{tpu_custom_call.1} parent=83 // pred_check
          %p1415 = pneg %p246
        $region86: #{tpu_custom_call.1} parent=83 // pred_check_branch
          %1417 = sbr.rel (%p1415) target = $region88
        $region87: #{tpu_custom_call.1} parent=83 // pred_region
          %s1418 = sand.u32 %s231, 1
          %s1419 = scalar_lea.sflag [#allocation4], %s1418
          %s1420 = sand.u32 %s231, 1
          %s1421 = smul.addr %s1420, 8
          %s1422 = scalar_lea.vmem [#allocation11], %s1421
          %1423 = dma.done %s1419, 128
        $region88: #{tpu_custom_call.1} parent=83 // pred_fallthru
          _
      $region84: #{tpu_custom_call.1} parent=5 // pred_fallthru
        _
    $region6: #{tpu_custom_call.1} parent=1 // loop_footer
      %s27 = sadd.s32 1, %s23
    $region7: #{tpu_custom_call.1} parent=1 // loop_footer_branch
      %22 = sbr.rel target = $region3
    $region8: #{tpu_custom_call.1} parent=1 // loop_exit
      _
    %1424 = vsyncpa [#allocation3], 1
    %s1425 = scalar_lea.sflag [#allocation3], 1
    %1426 = vsyncpa %s1425, 1
    %1427 = vsyncpa [#allocation6], 1
    %1428 = vsyncpa [#allocation9], 1
    %1429 = vsyncpa [#allocation4], 1
    %s1430 = scalar_lea.sflag [#allocation4], 1
    %1431 = vsyncpa %s1430, 1

</llo_original>
